<compile_context>
chip_gen: v5e
topology: v5e:2x2
jax: 0.10.0
libtpu: 0.0.40
codegen_flags: <defaults>
</compile_context>

<pallas_src>
import functools

import jax
import jax.numpy as jnp
from jax import lax
from jax.experimental import pallas as pl
from jax.experimental.pallas import tpu as pltpu


# ---------------------------------------------------------------------------
# Small, self-consistent config (shrunk from the original
# dim_inputSpat=128 / dim_inputTemp=49 / conv_dim=(32,)*4 to tiny test sizes).
# ---------------------------------------------------------------------------
DIM_INPUT_SPAT = 16            # original: 128  -> output dim = 16*16 = 256
DIM_INPUT_TEMP = 16            # original: 49
CONV_DIM = (4, 4, 4, 4)        # original: (32, 32, 32, 32)
CONV_KERNEL = (3, 3, 3, 3)
CONV_STRIDE = (1, 1, 1, 1)
LN_EPS = 1e-5


def _get_temp_output_dim():
    """Same arithmetic as the PyTorch _get_tempOutputDim."""
    dim_t = DIM_INPUT_TEMP
    for k, s in zip(CONV_KERNEL, CONV_STRIDE):
        dim_t = (dim_t - k) // s + 1
    return dim_t


DIM_TEMPORAL = _get_temp_output_dim()                 # 16 -> 14 -> 12 -> 10 -> 8
IN_FEATURES = CONV_DIM[-1] * DIM_TEMPORAL             # 4 * 8 = 32
OUT_FEATURES = DIM_INPUT_SPAT * DIM_INPUT_SPAT        # 256


# ---------------------------------------------------------------------------
# Tiling / VMEM-budget selection (Python level, outside jit)
# ---------------------------------------------------------------------------
def _vmem_budget_bytes():
    """<= 75% of the chip's per-core VMEM; conservative 48 MiB fallback."""
    try:
        cap = pltpu.get_tpu_info().vmem_capacity_bytes
    except Exception:
        cap = 64 << 20          # assume the smallest (v7x) if the query fails
    return int(0.75 * cap)


def _select_tiling(batch, feat, out_dim, tile_n):
    """Pick the W tile width and an explicit scoped-VMEM limit."""
    budget = _vmem_budget_bytes()
    w_budget = max(budget // 2, 2 << 20)        # room for double-buffered W
    per_tile_cap = min(w_budget // 2, 8 << 20)  # ~2-8 MB tiles hit the roofline

    if tile_n is not None:
        tn = int(tile_n)
        if tn % 128 != 0 or out_dim % tn != 0:
            raise ValueError(
                f"tile_n={tn} must be a multiple of 128 dividing D={out_dim}")
    else:
        tn = None
        cand = 128
        while cand <= out_dim:
            if out_dim % cand == 0 and feat * cand * 2 <= per_tile_cap:
                tn = cand
            cand += 128
        if tn is None:
            # D has no multiple-of-128 divisor under the cap; last resort.
            if feat * out_dim * 2 > per_tile_cap:
                raise ValueError(
                    f"cannot tile D={out_dim} within the VMEM budget")
            tn = out_dim

    est = (2 * batch * feat * 2      # x (bf16)
           + 2 * feat * tn * 2       # W tile (bf16, double-buffered)
           + 2 * tn * 4              # bias tile (double-buffered)
           + 2 * out_dim * 4 * 2     # gamma / beta (resident)
           + 2 * batch * out_dim * 4 # output block
           + 4 * batch * 4)          # LN stat scratches
    vmem_limit = min(max(int(1.5 * est) + (2 << 20), 4 << 20), budget)
    return tn, vmem_limit


# ---------------------------------------------------------------------------
# Pallas kernel: fused (streamed) Linear + LayerNorm + Softplus
# ---------------------------------------------------------------------------
def _fe_fc_kernel(x_ref, w_ref, b_ref, g_ref, beta_ref, o_ref,
                  sum_ref, sq_ref):
    # x_ref:    (B, F)   bf16  resident across the whole grid (tiny)
    # w_ref:    (F, TN)  bf16  streamed weight tile (double-buffered by Pallas)
    # b_ref:    (1, TN)  f32   bias tile
    # g_ref:    (1, D)   f32   LayerNorm gamma (resident)
    # beta_ref: (1, D)   f32   LayerNorm beta  (resident)
    # o_ref:    (B, D)   f32   output block (resident; pre-LN rows accumulate
    #                          here tile-by-tile, overwritten in the finalize)
    # sum_ref:  (B, 1)   f32   running per-row sum      (LN statistics)
    # sq_ref:   (B, 1)   f32   running per-row sum(x^2) (LN statistics)
    j = pl.program_id(0)
    tn = w_ref.shape[1]
    d = o_ref.shape[1]

    @pl.when(j == 0)
    def _init():
        sum_ref[...] = jnp.zeros_like(sum_ref)
        sq_ref[...] = jnp.zeros_like(sq_ref)

    # Linear tile: bf16 x bf16 on the MXU, f32 accumulation; add bias tile.
    y_tile = jnp.dot(x_ref[...], w_ref[...],
                     preferred_element_type=jnp.float32) + b_ref[...]

    # Per-tile LN statistics (cheap VPU work, hidden under the W DMA).
    sum_ref[...] += jnp.sum(y_tile, axis=-1, keepdims=True)
    sq_ref[...] += jnp.sum(y_tile * y_tile, axis=-1, keepdims=True)

    # Store the pre-LN tile straight into the resident output block.
    col0 = pl.multiple_of(j * tn, tn)            # lane-aligned start
    o_ref[:, pl.ds(col0, tn)] = y_tile

    # Finalize once: normalize + affine + Softplus over the full row.
    @pl.when(j == pl.num_programs(0) - 1)
    def _finalize():
        inv_d = 1.0 / d
        mean = sum_ref[...] * inv_d
        var = jnp.maximum(sq_ref[...] * inv_d - mean * mean, 0.0)  # biased var
        inv_std = lax.rsqrt(var + LN_EPS)
        y = o_ref[...]
        z = (y - mean) * inv_std * g_ref[...] + beta_ref[...]
        # Numerically stable Softplus: max(z, 0) + log1p(exp(-|z|))
        o_ref[...] = jnp.maximum(z, 0.0) + jnp.log1p(jnp.exp(-jnp.abs(z)))


@functools.partial(jax.jit, static_argnames=("tn", "vmem_limit"))
def _fe_fc_call(x, w, b, gamma, beta, *, tn, vmem_limit):
    B, F = x.shape
    D = w.shape[1]
    grid_n = D // tn

    # x is tiny -> cast here.  W should already be bf16 (cast once by the
    # caller at parameter-init time); the astype below is a no-op in that case.
    x_bf = x.astype(jnp.bfloat16)
    w_bf = w if w.dtype == jnp.bfloat16 else w.astype(jnp.bfloat16)
    b2 = b.reshape(1, D).astype(jnp.float32)
    g2 = gamma.reshape(1, D).astype(jnp.float32)
    be2 = beta.reshape(1, D).astype(jnp.float32)

    return pl.pallas_call(
        _fe_fc_kernel,
        out_shape=jax.ShapeDtypeStruct((B, D), jnp.float32),
        grid_spec=pltpu.PrefetchScalarGridSpec(
            num_scalar_prefetch=0,
            grid=(grid_n,),
            in_specs=[
                pl.BlockSpec((B, F), lambda j: (0, 0)),    # x resident
                pl.BlockSpec((F, tn), lambda j: (0, j)),   # stream W over D
                pl.BlockSpec((1, tn), lambda j: (0, j)),   # bias tile
                pl.BlockSpec((1, D), lambda j: (0, 0)),    # gamma resident
                pl.BlockSpec((1, D), lambda j: (0, 0)),    # beta resident
            ],
            out_specs=pl.BlockSpec((B, D), lambda j: (0, 0)),  # resident output
            scratch_shapes=[
                pltpu.VMEM((B, 1), jnp.float32),   # running sum
                pltpu.VMEM((B, 1), jnp.float32),   # running sum of squares
            ],
        ),
        compiler_params=pltpu.CompilerParams(
            # The D axis carries the resident output / stats -> "arbitrary".
            dimension_semantics=("arbitrary",),
            vmem_limit_bytes=vmem_limit,
        ),
    )(x_bf, w_bf, b2, g2, be2)


def fe_fc_forward(hidden_states, w, b, gamma, beta, *, tile_n=None):
    """hidden_states: (B, C, T) float32. Returns (B, D) float32.

    w: (F, D) = fc.weight.T -- ideally already stored as bfloat16 so no
       per-call cast is emitted.  b / gamma / beta: (D,).
    tile_n: optional lane width of the streamed weight tile (multiple of 128
            dividing D).  Default None -> auto-pick from the VMEM budget
            (~2048 at the production shape F=1312, D=16384).
    """
    B = hidden_states.shape[0]
    x = hidden_states.reshape(B, -1)                     # flatten(start_dim=1)
    F = x.shape[1]
    D = w.shape[1]
    tn, vmem_limit = _select_tiling(B, F, D, tile_n)
    return _fe_fc_call(x, w, b, gamma, beta, tn=tn, vmem_limit=vmem_limit)


# ---------------------------------------------------------------------------
# Pure-JAX reference (matches the kernel's bf16-matmul / f32-LN numerics)
# ---------------------------------------------------------------------------
def fe_fc_reference(hidden_states, w, b, gamma, beta):
    B = hidden_states.shape[0]
    x = hidden_states.reshape(B, -1)
    xb = x.astype(jnp.bfloat16).astype(jnp.float32)
    wb = w.astype(jnp.bfloat16).astype(jnp.float32)
    y = xb @ wb + b
    mean = jnp.mean(y, axis=-1, keepdims=True)
    centered = y - mean
    var = jnp.mean(centered * centered, axis=-1, keepdims=True)
    z = centered * lax.rsqrt(var + LN_EPS) * gamma + beta
    return jnp.maximum(z, 0.0) + jnp.log1p(jnp.exp(-jnp.abs(z)))


if __name__ == "__main__":
    key = jax.random.PRNGKey(0)
    k_x, k_w, k_b = jax.random.split(key, 3)

    batch = 2
    # Module input: (B, conv_dim[-1], dim_temporal) = (2, 4, 8)
    hidden_states = jax.random.normal(
        k_x, (batch, CONV_DIM[-1], DIM_TEMPORAL), dtype=jnp.float32)

    # Deterministic parameter init (shapes match nn.Linear / nn.LayerNorm).
    bound = 1.0 / (IN_FEATURES ** 0.5)
    w = jax.random.uniform(
        k_w, (IN_FEATURES, OUT_FEATURES), dtype=jnp.float32,
        minval=-bound, maxval=bound)                       # fc.weight.T
    b = jax.random.uniform(
        k_b, (OUT_FEATURES,), dtype=jnp.float32,
        minval=-bound, maxval=bound)                       # fc.bias
    gamma = jnp.ones((OUT_FEATURES,), dtype=jnp.float32)   # layer_norm.weight
    beta = jnp.zeros((OUT_FEATURES,), dtype=jnp.float32)   # layer_norm.bias

    # Store the weight in bf16 ONCE (per perf review: no per-call f32->bf16
    # cast of the full weight matrix).
    w_bf16 = w.astype(jnp.bfloat16)

    # tile_n=128 -> grid of D//128 = 2 steps at the test shape, exercising the
    # streamed-W + running-LN-stats + finalize path.
    out = fe_fc_forward(hidden_states, w_bf16, b, gamma, beta, tile_n=128)
    out = jax.block_until_ready(out)

    ref = fe_fc_reference(hidden_states, w, b, gamma, beta)
    assert out.shape == (batch, OUT_FEATURES), out.shape
    assert jnp.allclose(out, ref, atol=1e-3, rtol=1e-3), "mismatch vs reference"

    # Also exercise the auto tile-size selection (single-tile grid here).
    out_auto = jax.block_until_ready(
        fe_fc_forward(hidden_states, w_bf16, b, gamma, beta))
    assert jnp.allclose(out_auto, ref, atol=1e-3, rtol=1e-3), "auto-tile mismatch"

    print("KERNEL_OK")
</pallas_src>

<mosaic_0001>
module attributes {stable_mosaic.version = 11 : i64} {
  func.func @_fe_fc_kernel(%arg0: i32, %arg1: memref<2x32xbf16, #tpu.memory_space<vmem>>, %arg2: memref<32x128xbf16, #tpu.memory_space<vmem>>, %arg3: memref<1x128xf32, #tpu.memory_space<vmem>>, %arg4: memref<1x256xf32, #tpu.memory_space<vmem>>, %arg5: memref<1x256xf32, #tpu.memory_space<vmem>>, %arg6: memref<2x256xf32, #tpu.memory_space<vmem>>, %arg7: memref<2x1xf32, #tpu.memory_space<vmem>>, %arg8: memref<2x1xf32, #tpu.memory_space<vmem>>) attributes {dimension_semantics = [#tpu.dimension_semantics<arbitrary>], iteration_bounds = array<i64: 2>, scalar_prefetch = 0 : i64, scratch_operands = 2 : i64, tpu.core_type = #tpu.core_type<tc>, window_params = [{pipeline_mode = #tpu.pipeline_mode<synchronous>, transform_indices = @transform_0, window_bounds = array<i64: 2, 32>}, {transform_indices = @transform_1, window_bounds = array<i64: 32, 128>}, {transform_indices = @transform_2, window_bounds = array<i64: 1, 128>}, {pipeline_mode = #tpu.pipeline_mode<synchronous>, transform_indices = @transform_3, window_bounds = array<i64: 1, 256>}, {pipeline_mode = #tpu.pipeline_mode<synchronous>, transform_indices = @transform_4, window_bounds = array<i64: 1, 256>}, {pipeline_mode = #tpu.pipeline_mode<synchronous>, transform_indices = @transform_5, window_bounds = array<i64: 2, 256>}]} {
    %c0_i32 = arith.constant 0 : i32
    %0 = arith.cmpi eq, %arg0, %c0_i32 : i32
    %1 = arith.extui %0 : i1 to i32
    %c0_i32_0 = arith.constant 0 : i32
    %2 = arith.cmpi ne, %1, %c0_i32_0 : i32
    scf.if %2 {
      %cst_18 = arith.constant 0.000000e+00 : f32
      %27 = vector.broadcast %cst_18 : f32 to vector<2x1xf32>
      %c0_19 = arith.constant 0 : index
      %c0_20 = arith.constant 0 : index
      %28 = vector.load %arg7[%c0_19, %c0_20] : memref<2x1xf32, #tpu.memory_space<vmem>>, vector<2x1xf32>
      tpu.vector_store %arg7[%c0_19, %c0_20], %27 {strides = array<i32>} : memref<2x1xf32, #tpu.memory_space<vmem>>, vector<2x1xf32>,
      %cst_21 = arith.constant 0.000000e+00 : f32
      %29 = vector.broadcast %cst_21 : f32 to vector<2x1xf32>
      %c0_22 = arith.constant 0 : index
      %c0_23 = arith.constant 0 : index
      %30 = vector.load %arg8[%c0_22, %c0_23] : memref<2x1xf32, #tpu.memory_space<vmem>>, vector<2x1xf32>
      tpu.vector_store %arg8[%c0_22, %c0_23], %29 {strides = array<i32>} : memref<2x1xf32, #tpu.memory_space<vmem>>, vector<2x1xf32>,
    } else {
    }
    %c0 = arith.constant 0 : index
    %c0_1 = arith.constant 0 : index
    %3 = vector.load %arg1[%c0, %c0_1] : memref<2x32xbf16, #tpu.memory_space<vmem>>, vector<2x32xbf16>
    %c0_2 = arith.constant 0 : index
    %c0_3 = arith.constant 0 : index
    %4 = vector.load %arg2[%c0_2, %c0_3] : memref<32x128xbf16, #tpu.memory_space<vmem>>, vector<32x128xbf16>
    %cst = arith.constant dense<0.000000e+00> : vector<2x128xf32>
    %5 = tpu.matmul %3, %4, %cst {dimension_numbers = #tpu.dot_dimension_numbers<[1], [0], [0], [1], [0, 0, 1, 1], [], []>} : vector<2x32xbf16>, vector<32x128xbf16>, vector<2x128xf32> -> vector<2x128xf32>
    %c0_4 = arith.constant 0 : index
    %c0_5 = arith.constant 0 : index
    %6 = vector.load %arg3[%c0_4, %c0_5] : memref<1x128xf32, #tpu.memory_space<vmem>>, vector<1x128xf32>
    %7 = vector.broadcast %6 : vector<1x128xf32> to vector<2x128xf32>
    %8 = arith.addf %5, %7 : vector<2x128xf32>
    %c0_6 = arith.constant 0 : index
    %c0_7 = arith.constant 0 : index
    %9 = vector.load %arg7[%c0_6, %c0_7] : memref<2x1xf32, #tpu.memory_space<vmem>>, vector<2x1xf32>
    %cst_8 = arith.constant dense<0.000000e+00> : vector<2xf32>
    %10 = vector.multi_reduction <add>, %8, %cst_8 [1] : vector<2x128xf32> to vector<2xf32>
    %11 = vector.shape_cast %10 : vector<2xf32> to vector<2x1xf32>
    %12 = arith.addf %9, %11 : vector<2x1xf32>
    %c0_9 = arith.constant 0 : index
    %c0_10 = arith.constant 0 : index
    %13 = vector.load %arg7[%c0_9, %c0_10] : memref<2x1xf32, #tpu.memory_space<vmem>>, vector<2x1xf32>
    tpu.vector_store %arg7[%c0_9, %c0_10], %12 {strides = array<i32>} : memref<2x1xf32, #tpu.memory_space<vmem>>, vector<2x1xf32>,
    %c0_11 = arith.constant 0 : index
    %c0_12 = arith.constant 0 : index
    %14 = vector.load %arg8[%c0_11, %c0_12] : memref<2x1xf32, #tpu.memory_space<vmem>>, vector<2x1xf32>
    %15 = arith.mulf %8, %8 : vector<2x128xf32>
    %cst_13 = arith.constant dense<0.000000e+00> : vector<2xf32>
    %16 = vector.multi_reduction <add>, %15, %cst_13 [1] : vector<2x128xf32> to vector<2xf32>
    %17 = vector.shape_cast %16 : vector<2xf32> to vector<2x1xf32>
    %18 = arith.addf %14, %17 : vector<2x1xf32>
    %c0_14 = arith.constant 0 : index
    %c0_15 = arith.constant 0 : index
    %19 = vector.load %arg8[%c0_14, %c0_15] : memref<2x1xf32, #tpu.memory_space<vmem>>, vector<2x1xf32>
    tpu.vector_store %arg8[%c0_14, %c0_15], %18 {strides = array<i32>} : memref<2x1xf32, #tpu.memory_space<vmem>>, vector<2x1xf32>,
    %c128_i32 = arith.constant 128 : i32
    %20 = arith.muli %arg0, %c128_i32 : i32
    %21 = tpu.assume_multiple %20, 128 : i32
    %c0_16 = arith.constant 0 : index
    %22 = arith.index_cast %21 : i32 to index
    %23 = vector.load %arg6[%c0_16, %22] : memref<2x256xf32, #tpu.memory_space<vmem>>, vector<2x128xf32>
    tpu.vector_store %arg6[%c0_16, %22], %8 {strides = array<i32>} : memref<2x256xf32, #tpu.memory_space<vmem>>, vector<2x128xf32>,
    %c1_i32 = arith.constant 1 : i32
    %24 = arith.cmpi eq, %arg0, %c1_i32 : i32
    %25 = arith.extui %24 : i1 to i32
    %c0_i32_17 = arith.constant 0 : i32
    %26 = arith.cmpi ne, %25, %c0_i32_17 : i32
    scf.if %26 {
      %c0_18 = arith.constant 0 : index
      %c0_19 = arith.constant 0 : index
      %27 = vector.load %arg7[%c0_18, %c0_19] : memref<2x1xf32, #tpu.memory_space<vmem>>, vector<2x1xf32>
      %cst_20 = arith.constant 3.906250e-03 : f32
      %28 = vector.broadcast %cst_20 : f32 to vector<2x1xf32>
      %29 = arith.mulf %27, %28 : vector<2x1xf32>
      %c0_21 = arith.constant 0 : index
      %c0_22 = arith.constant 0 : index
      %30 = vector.load %arg8[%c0_21, %c0_22] : memref<2x1xf32, #tpu.memory_space<vmem>>, vector<2x1xf32>
      %cst_23 = arith.constant 3.906250e-03 : f32
      %31 = vector.broadcast %cst_23 : f32 to vector<2x1xf32>
      %32 = arith.mulf %30, %31 : vector<2x1xf32>
      %33 = arith.mulf %29, %29 : vector<2x1xf32>
      %34 = arith.subf %32, %33 : vector<2x1xf32>
      %cst_24 = arith.constant 0.000000e+00 : f32
      %35 = vector.broadcast %cst_24 : f32 to vector<2x1xf32>
      %36 = arith.maximumf %34, %35 : vector<2x1xf32>
      %cst_25 = arith.constant 9.99999974E-6 : f32
      %37 = vector.broadcast %cst_25 : f32 to vector<2x1xf32>
      %38 = arith.addf %36, %37 : vector<2x1xf32>
      %39 = math.rsqrt %38 : vector<2x1xf32>
      %c0_26 = arith.constant 0 : index
      %c0_27 = arith.constant 0 : index
      %40 = vector.load %arg6[%c0_26, %c0_27] : memref<2x256xf32, #tpu.memory_space<vmem>>, vector<2x256xf32>
      %41 = vector.broadcast %29 : vector<2x1xf32> to vector<2x256xf32>
      %42 = arith.subf %40, %41 : vector<2x256xf32>
      %43 = vector.broadcast %39 : vector<2x1xf32> to vector<2x256xf32>
      %44 = arith.mulf %42, %43 : vector<2x256xf32>
      %c0_28 = arith.constant 0 : index
      %c0_29 = arith.constant 0 : index
      %45 = vector.load %arg4[%c0_28, %c0_29] : memref<1x256xf32, #tpu.memory_space<vmem>>, vector<1x256xf32>
      %46 = vector.broadcast %45 : vector<1x256xf32> to vector<2x256xf32>
      %47 = arith.mulf %44, %46 : vector<2x256xf32>
      %c0_30 = arith.constant 0 : index
      %c0_31 = arith.constant 0 : index
      %48 = vector.load %arg5[%c0_30, %c0_31] : memref<1x256xf32, #tpu.memory_space<vmem>>, vector<1x256xf32>
      %49 = vector.broadcast %48 : vector<1x256xf32> to vector<2x256xf32>
      %50 = arith.addf %47, %49 : vector<2x256xf32>
      %cst_32 = arith.constant 0.000000e+00 : f32
      %51 = vector.broadcast %cst_32 : f32 to vector<2x256xf32>
      %52 = arith.maximumf %50, %51 : vector<2x256xf32>
      %53 = math.absf %50 : vector<2x256xf32>
      %cst_33 = arith.constant 0.000000e+00 : f32
      %54 = vector.broadcast %cst_33 : f32 to vector<2x256xf32>
      %55 = arith.subf %54, %53 : vector<2x256xf32>
      %56 = math.exp %55 : vector<2x256xf32>
      %57 = math.log1p %56 : vector<2x256xf32>
      %58 = arith.addf %52, %57 : vector<2x256xf32>
      %c0_34 = arith.constant 0 : index
      %c0_35 = arith.constant 0 : index
      %59 = vector.load %arg6[%c0_34, %c0_35] : memref<2x256xf32, #tpu.memory_space<vmem>>, vector<2x256xf32>
      tpu.vector_store %arg6[%c0_34, %c0_35], %58 {strides = array<i32>} : memref<2x256xf32, #tpu.memory_space<vmem>>, vector<2x256xf32>,
    } else {
    }
    return
  }
  func.func @transform_0(%arg0: i32) -> (i32, i32) {
    %c0_i32 = arith.constant 0 : i32
    %c0_i32_0 = arith.constant 0 : i32
    %c0_i32_1 = arith.constant 0 : i32
    return %c0_i32, %c0_i32_0 : i32, i32
  }
  func.func @transform_1(%arg0: i32) -> (i32, i32) {
    %c0_i32 = arith.constant 0 : i32
    %c0_i32_0 = arith.constant 0 : i32
    return %c0_i32, %arg0 : i32, i32
  }
  func.func @transform_2(%arg0: i32) -> (i32, i32) {
    %c0_i32 = arith.constant 0 : i32
    %c0_i32_0 = arith.constant 0 : i32
    return %c0_i32, %arg0 : i32, i32
  }
  func.func @transform_3(%arg0: i32) -> (i32, i32) {
    %c0_i32 = arith.constant 0 : i32
    %c0_i32_0 = arith.constant 0 : i32
    %c0_i32_1 = arith.constant 0 : i32
    return %c0_i32, %c0_i32_0 : i32, i32
  }
  func.func @transform_4(%arg0: i32) -> (i32, i32) {
    %c0_i32 = arith.constant 0 : i32
    %c0_i32_0 = arith.constant 0 : i32
    %c0_i32_1 = arith.constant 0 : i32
    return %c0_i32, %c0_i32_0 : i32, i32
  }
  func.func @transform_5(%arg0: i32) -> (i32, i32) {
    %c0_i32 = arith.constant 0 : i32
    %c0_i32_0 = arith.constant 0 : i32
    %c0_i32_1 = arith.constant 0 : i32
    return %c0_i32, %c0_i32_0 : i32, i32
  }
}

</mosaic_0001>

<llo_original>
// kernel: _fe_fc_call.1
$region0: #{_fe_fc_call.1}
  #allocation0 [shape = 'u32[]', space=smem, size = 0x4, offset = 0x4, fixed_abs, tag = 'smem constant byte address 0x4 - core index']
  #allocation1 [shape = 'u32[72,128]{1,0:T(1,128)}', space=vmem, size = 0x9000, scoped, tag = 'internal scratch']
  #allocation2 [shape = 'f32[2,1]{1,0:T(2,128)}', space=vmem, size = 0x400, scoped, tag = 'scratch operand']
  #allocation3 [shape = 'f32[2,1]{1,0:T(2,128)}', space=vmem, size = 0x400, scoped, tag = 'scratch operand']
  %s0 = inlined_call_operand.vmem [shape: bf16[2,32], index: 0, kind: input, shape index: {}]
  %s1 = inlined_call_operand.hbm [shape: bf16[32,256], index: 1, kind: input, shape index: {}]
  %s2 = inlined_call_operand.vmem [shape: f32[1,256], index: 2, kind: input, shape index: {}]
  %s3 = inlined_call_operand.vmem [shape: f32[1,256], index: 3, kind: input, shape index: {}]
  %s4 = inlined_call_operand.vmem [shape: f32[1,256], index: 4, kind: input, shape index: {}]
  %s5 = inlined_call_operand.hbm [shape: f32[2,256], index: 5, kind: output, shape index: {}]
  %s6 = sld [smem:[#allocation0]]
  $region65: #{_fe_fc_call.1} parent=0
    _
  %s8 = ssub.s32 1, %s6
  %s9 = scalar_select 0, %s8, %s6
  $region1: #{_fe_fc_call.1} parent=0
    #allocation4 [shape = 'u8[16384]{0}', space=vmem, size = 0x4000, scoped, tag = 'input window, operand 1']
    #allocation5 [shape = 's32[2]{0}', space=sflag, size = 0x8, scoped, tag = 'scoped memory for _fe_fc_call.1']
    #allocation6 [shape = 's32[2]{0}', space=sflag, size = 0x8, scoped, tag = 'scoped memory for _fe_fc_call.1']
    #allocation7 [shape = 'u8[2048]{0}', space=vmem, size = 0x800, scoped, tag = 'output window, operand 0, single buffered']
    %10 = vsyncpa [#allocation5], 0
    %s11 = scalar_lea.sflag [#allocation5], 1
    %12 = vsyncpa %s11, 0
    %13 = vsyncpa [#allocation6], 0
    loop: start=0, step=1, limit=4
    $region2: #{_fe_fc_call.1} parent=1 // loop_pre_header
      _
    $region3: #{_fe_fc_call.1} parent=1 // loop_header
      %s15 = sphi 0, %s19
      %p16 = scmp.ge.s32.totalorder %s15, 4
      %s23 = sphi 0, %s23
      %s25 = sphi 0, %s23
      %s26 = sphi 0, %s25
      %s40 = sphi 0, %s26
      %s46 = sphi 0, %s48
      %s49 = sphi 0, %s46
      %s50 = sphi 0, %s49
      %s66 = sphi 0, %s50
      %s72 = sphi 0, %s74
      %s75 = sphi 0, %s72
      %s76 = sphi 0, %s75
      %s92 = sphi 0, %s76
      %s96 = sphi 0, %s96
      %s98 = sphi 0, %s96
      %s99 = sphi 0, %s98
      %s113 = sphi 0, %s99
      %s117 = sphi 0, %s117
      %s119 = sphi 0, %s117
      %s120 = sphi 0, %s119
      %s134 = sphi 0, %s120
      %s138 = sphi 0, %s138
      %s140 = sphi 0, %s138
      %s141 = sphi 0, %s140
      %s155 = sphi 0, %s141
    $region4: #{_fe_fc_call.1} parent=1 // loop_header_branch
      %18 = sbr.rel (%p16) target = $region8
    $region5: #{_fe_fc_call.1} parent=1 // loop_body
      %s20 = ssub.s32 %s15, 1
      %s21 = ssub.s32 %s15, 2
      %s22 = sadd.s32 %s15, 1
      %s24 = sadd.s32 %s23, 1
      %p27 = scmp.eq.s32.totalorder %s15, 1
      %p28 = scmp.ne.s32.totalorder %s23, %s25
      %p29 = scmp.eq.s32.totalorder %s15, 0
      %p30 = por %p28, %p29
      %p31 = scmp.ne.s32.totalorder %s23, %s25
      %p32 = scmp.eq.s32.totalorder %s20, 1
      %p33 = por %p31, %p32
      %p34 = scmp.ne.s32.totalorder %s25, %s26
      %p35 = scmp.eq.s32.totalorder %s20, 0
      %p36 = por %p34, %p35
      %p37 = scmp.ne.s32.totalorder %s25, %s26
      %p38 = scmp.eq.s32.totalorder %s21, 1
      %p39 = por %p37, %p38
      %p41 = scmp.ne.s32.totalorder %s26, %s40
      %p42 = scmp.eq.s32.totalorder %s21, 0
      %p43 = por %p41, %p42
      %s44 = ssub.s32 %s15, %s22
      %p45 = scmp.eq.s32.totalorder %s44, 0
      %s47 = sadd.s32 %s46, 1
      %s48 = scalar_select %p45, %s46, %s47
      %p51 = pneg %p45
      %p52 = scmp.eq.s32.totalorder %s15, 1
      %p53 = por %p51, %p52
      %p54 = scmp.ne.s32.totalorder %s46, %s49
      %p55 = scmp.eq.s32.totalorder %s15, 0
      %p56 = por %p54, %p55
      %p57 = scmp.ne.s32.totalorder %s46, %s49
      %p58 = scmp.eq.s32.totalorder %s20, 1
      %p59 = por %p57, %p58
      %p60 = scmp.ne.s32.totalorder %s49, %s50
      %p61 = scmp.eq.s32.totalorder %s20, 0
      %p62 = por %p60, %p61
      %p63 = scmp.ne.s32.totalorder %s49, %s50
      %p64 = scmp.eq.s32.totalorder %s21, 1
      %p65 = por %p63, %p64
      %p67 = scmp.ne.s32.totalorder %s50, %s66
      %p68 = scmp.eq.s32.totalorder %s21, 0
      %p69 = por %p67, %p68
      %s70 = ssub.s32 %s15, %s22
      %p71 = scmp.eq.s32.totalorder %s70, 0
      %s73 = sadd.s32 %s72, 1
      %s74 = scalar_select %p71, %s72, %s73
      %p77 = pneg %p71
      %p78 = scmp.eq.s32.totalorder %s15, 1
      %p79 = por %p77, %p78
      %p80 = scmp.ne.s32.totalorder %s72, %s75
      %p81 = scmp.eq.s32.totalorder %s15, 0
      %p82 = por %p80, %p81
      %p83 = scmp.ne.s32.totalorder %s72, %s75
      %p84 = scmp.eq.s32.totalorder %s20, 1
      %p85 = por %p83, %p84
      %p86 = scmp.ne.s32.totalorder %s75, %s76
      %p87 = scmp.eq.s32.totalorder %s20, 0
      %p88 = por %p86, %p87
      %p89 = scmp.ne.s32.totalorder %s75, %s76
      %p90 = scmp.eq.s32.totalorder %s21, 1
      %p91 = por %p89, %p90
      %p93 = scmp.ne.s32.totalorder %s76, %s92
      %p94 = scmp.eq.s32.totalorder %s21, 0
      %p95 = por %p93, %p94
      %s97 = sadd.s32 %s96, 1
      %p100 = scmp.eq.s32.totalorder %s15, 1
      %p101 = scmp.ne.s32.totalorder %s96, %s98
      %p102 = scmp.eq.s32.totalorder %s15, 0
      %p103 = por %p101, %p102
      %p104 = scmp.ne.s32.totalorder %s96, %s98
      %p105 = scmp.eq.s32.totalorder %s20, 1
      %p106 = por %p104, %p105
      %p107 = scmp.ne.s32.totalorder %s98, %s99
      %p108 = scmp.eq.s32.totalorder %s20, 0
      %p109 = por %p107, %p108
      %p110 = scmp.ne.s32.totalorder %s98, %s99
      %p111 = scmp.eq.s32.totalorder %s21, 1
      %p112 = por %p110, %p111
      %p114 = scmp.ne.s32.totalorder %s99, %s113
      %p115 = scmp.eq.s32.totalorder %s21, 0
      %p116 = por %p114, %p115
      %s118 = sadd.s32 %s117, 1
      %p121 = scmp.eq.s32.totalorder %s15, 1
      %p122 = scmp.ne.s32.totalorder %s117, %s119
      %p123 = scmp.eq.s32.totalorder %s15, 0
      %p124 = por %p122, %p123
      %p125 = scmp.ne.s32.totalorder %s117, %s119
      %p126 = scmp.eq.s32.totalorder %s20, 1
      %p127 = por %p125, %p126
      %p128 = scmp.ne.s32.totalorder %s119, %s120
      %p129 = scmp.eq.s32.totalorder %s20, 0
      %p130 = por %p128, %p129
      %p131 = scmp.ne.s32.totalorder %s119, %s120
      %p132 = scmp.eq.s32.totalorder %s21, 1
      %p133 = por %p131, %p132
      %p135 = scmp.ne.s32.totalorder %s120, %s134
      %p136 = scmp.eq.s32.totalorder %s21, 0
      %p137 = por %p135, %p136
      %s139 = sadd.s32 %s138, 1
      %p142 = scmp.eq.s32.totalorder %s15, 1
      %p143 = scmp.ne.s32.totalorder %s138, %s140
      %p144 = scmp.eq.s32.totalorder %s15, 0
      %p145 = por %p143, %p144
      %p146 = scmp.ne.s32.totalorder %s138, %s140
      %p147 = scmp.eq.s32.totalorder %s20, 1
      %p148 = por %p146, %p147
      %p149 = scmp.ne.s32.totalorder %s140, %s141
      %p150 = scmp.eq.s32.totalorder %s20, 0
      %p151 = por %p149, %p150
      %p152 = scmp.ne.s32.totalorder %s140, %s141
      %p153 = scmp.eq.s32.totalorder %s21, 1
      %p154 = por %p152, %p153
      %p156 = scmp.ne.s32.totalorder %s141, %s155
      %p157 = scmp.eq.s32.totalorder %s21, 0
      %p158 = por %p156, %p157
      %p159 = scmp.le.s32.totalorder 1, %s15
      %p160 = scmp.lt.s32.totalorder %s15, 3
      %p161 = pnand %p159, %p160
      %p162 = pneg %p161
      // Predicated region
      $region9: #{_fe_fc_call.1} parent=5 // pred_check
        _
      $region10: #{_fe_fc_call.1} parent=5 // pred_check_branch
        %164 = sbr.rel (%p161) target = $region12
      $region11: #{_fe_fc_call.1} parent=5 // pred_region
        %s165 = ssub.s32 %s15, 1
        // Predicated region
        $region13: #{_fe_fc_call.1} parent=11 // pred_check
          %p166 = pneg %p36
        $region14: #{_fe_fc_call.1} parent=11 // pred_check_branch
          %168 = sbr.rel (%p166) target = $region16
        $region15: #{_fe_fc_call.1} parent=11 // pred_region
          _
        $region16: #{_fe_fc_call.1} parent=11 // pred_fallthru
          _
        // Predicated region
        $region17: #{_fe_fc_call.1} parent=11 // pred_check
          %p169 = pneg %p109
        $region18: #{_fe_fc_call.1} parent=11 // pred_check_branch
          %171 = sbr.rel (%p169) target = $region20
        $region19: #{_fe_fc_call.1} parent=11 // pred_region
          _
        $region20: #{_fe_fc_call.1} parent=11 // pred_fallthru
          _
        // Predicated region
        $region21: #{_fe_fc_call.1} parent=11 // pred_check
          %p172 = pneg %p130
        $region22: #{_fe_fc_call.1} parent=11 // pred_check_branch
          %174 = sbr.rel (%p172) target = $region24
        $region23: #{_fe_fc_call.1} parent=11 // pred_region
          _
        $region24: #{_fe_fc_call.1} parent=11 // pred_fallthru
          _
      $region12: #{_fe_fc_call.1} parent=5 // pred_fallthru
        _
      %p175 = scmp.lt.s32.totalorder %s15, 2
      // Predicated region
      $region25: #{_fe_fc_call.1} parent=5 // pred_check
        %p176 = pneg %p175
      $region26: #{_fe_fc_call.1} parent=5 // pred_check_branch
        %178 = sbr.rel (%p176) target = $region28
      $region27: #{_fe_fc_call.1} parent=5 // pred_region
        // Predicated region
        $region29: #{_fe_fc_call.1} parent=27 // pred_check
          %p179 = pneg %p56
        $region30: #{_fe_fc_call.1} parent=27 // pred_check_branch
          %181 = sbr.rel (%p179) target = $region32
        $region31: #{_fe_fc_call.1} parent=27 // pred_region
          %s182 = sand.u32 %s46, 1
          %s183 = scalar_lea.sflag [#allocation5], %s182
          %s184 = sand.u32 %s46, 1
          %s185 = smul.addr %s184, 16
          %s186 = scalar_lea.vmem [#allocation4], %s185
          %188 = vsyncadd %s183, 0
          %s189 = smul.addr %s15, 4
          %s190 = scalar_lea.hbm %s1, %s189
          %s191 = sshll.u32 %s190, 4
          %s192 = int_to_ptr.hbm [resolvable:$true] %s191
          %s193 = sshll.u32 %s186, 4
          %s194 = int_to_ptr.vmem [resolvable:$true] %s193
          %199 = dma.hbm_to_vmem [thread:$0]  %s192, 256, %s194, %s183, 128, 64, 4
        $region32: #{_fe_fc_call.1} parent=27 // pred_fallthru
          _
        // Predicated region
        $region33: #{_fe_fc_call.1} parent=27 // pred_check
          %p200 = pneg %p82
        $region34: #{_fe_fc_call.1} parent=27 // pred_check_branch
          %202 = sbr.rel (%p200) target = $region36
        $region35: #{_fe_fc_call.1} parent=27 // pred_region
          %p203 = scmp.lt.s32.totalorder %s15, 1
          %s204 = scalar_select %p203, %s15, 1
          %s205 = scalar_lea.vmem %s2, %s204
        $region36: #{_fe_fc_call.1} parent=27 // pred_fallthru
          _
      $region28: #{_fe_fc_call.1} parent=5 // pred_fallthru
        _
      %p206 = scmp.le.s32.totalorder 1, %s15
      %p207 = scmp.lt.s32.totalorder %s15, 3
      %p208 = pnand %p206, %p207
      %p209 = pneg %p208
      // Predicated region
      $region37: #{_fe_fc_call.1} parent=5 // pred_check
        _
      $region38: #{_fe_fc_call.1} parent=5 // pred_check_branch
        %211 = sbr.rel (%p208) target = $region40
      $region39: #{_fe_fc_call.1} parent=5 // pred_region
        %s212 = ssub.s32 %s15, 1
        %s213 = sand.u32 %s49, 1
        %s214 = scalar_lea.sflag [#allocation5], %s213
        %s215 = sand.u32 %s49, 1
        %s216 = smul.addr %s215, 16
        %s217 = scalar_lea.vmem [#allocation4], %s216
        // Predicated region
        $region41: #{_fe_fc_call.1} parent=39 // pred_check
          %p218 = pneg %p62
        $region42: #{_fe_fc_call.1} parent=39 // pred_check_branch
          %220 = sbr.rel (%p218) target = $region44
        $region43: #{_fe_fc_call.1} parent=39 // pred_region
          %222 = dma.done %s214, 256
        $region44: #{_fe_fc_call.1} parent=39 // pred_fallthru
          _
        %p223 = pneg %p36
        %p224 = pneg %p33
        %s225 = sand.u32 %s49, 1
        %s226 = scalar_lea.sflag [#allocation5], %s225
        %s227 = sand.u32 %s49, 1
        %s228 = smul.addr %s227, 16
        %s229 = scalar_lea.vmem [#allocation4], %s228
        %p230 = pneg %p62
        %p231 = pneg %p59
        %p232 = scmp.lt.s32.totalorder %s20, 1
        %s233 = scalar_select %p232, %s20, 1
        %s234 = scalar_lea.vmem %s2, %s233
        %p235 = pneg %p88
        %p236 = pneg %p85
        %p237 = pneg %p109
        %p238 = pneg %p106
        %p239 = pneg %p130
        %p240 = pneg %p127
        %p241 = pneg %p151
        %p242 = pneg %p148
        %p243 = scmp.lt.s32.totalorder %s20, 1
        %s244 = scalar_select %p243, %s20, 1
        %s245 = scalar_lea.vmem %s2, %s244
        %p247 = scmp.eq.s32.totalorder %s20, 0
        // Predicated region
        $region45: #{_fe_fc_call.1} parent=39 // pred_check
          %p248 = pneg %p247
        $region46: #{_fe_fc_call.1} parent=39 // pred_check_branch
          %250 = sbr.rel (%p248) target = $region48
        $region47: #{_fe_fc_call.1} parent=39 // pred_region
          %vm251 = vcmask 1024
          %252 = vst.msk [vmem:[#allocation2] sm:$0x3] %vm251, 0.0
          %253 = vst.msk [vmem:[#allocation3] sm:$0x3] %vm251, 0.0
        $region48: #{_fe_fc_call.1} parent=39 // pred_fallthru
          _
        %v254 = vld [vmem:[%s0] sm:$0x1]
        %v255 = vld [vmem:[%s217] sm:$0xf]
        %v256 = vld [vmem:[%s217 + $0x4] sm:$0xf]
        %v257 = vld [vmem:[%s217 + $0x8] sm:$0xf]
        %v258 = vld [vmem:[%s217 + $0xc] sm:$0xf]
        %v259 = vld [vmem:[%s245] sm:$0x1]
        %v261 = vperm.slane %v259, 0
        %v267 = vunpack.c.l.b16 %v255
        %v268 = vunpack.c.l.b16 %v256
        %v269 = vunpack.c.l.b16 %v257
        %v270 = vunpack.c.l.b16 %v258
        %v271 = vpack.c.b16 %v268, %v267
        %v272 = vpack.c.b16 %v270, %v269
        %vm275 = vcmask 261120
        %v277 = vsel %vm275, %v254, 0
        %279 = vmatpush.bf16.msra.mxu0 0
        %280 = vmatpush.bf16.msra.mxu0 0
        %281 = vmatpush.bf16.msra.mxu0 0
        %282 = vmatpush.bf16.msra.mxu0 0
        %283 = vmatpush.bf16.msra.mxu0 0
        %284 = vmatpush.bf16.msra.mxu0 0
        %285 = vmatpush.bf16.msra.mxu0 %v272
        %286 = vmatpush.bf16.msra.mxu0 %v271
        %287 = vmatmul.bf16.gmra.mxu0 %v277
        %v288 = vpop.f32.mrf.mxu0
        %v289 = vadd.f32 %v261, %v288
        %v290 = vpop.f32.mrf.mxu0
        %291 = vdwg.mxu0
        %v292 = vld [vmem:[#allocation2] sm:$0x3]
        %vm293 = vcmask 1041408
        %v294 = vsel %vm293, %v289, 0.0
        %295 = vadd.xlane.f32.xlu0 %v294
        %v296 = vpop.xlane.xlu0 %295
        %v297 = vadd.f32 %v292, %v296
        %vm298 = vcmask 1024
        %299 = vst.msk [vmem:[#allocation2] sm:$0x3] %vm298, %v297
        %v300 = vld [vmem:[#allocation3] sm:$0x3]
        %v301 = vmul.f32 %v289, %v289
        %v302 = vsel %vm293, %v301, 0.0
        %303 = vadd.xlane.f32.xlu0 %v302
        %v304 = vpop.xlane.xlu0 %303
        %v305 = vadd.f32 %v300, %v304
        %306 = vst.msk [vmem:[#allocation3] sm:$0x3] %vm298, %v305
        %s307 = smul.u32 %s20, 128
        %s308 = sshra.s32 %s307, 7
        %s309 = sand.u32 %s307, 127
        %s310 = smul.addr %s308, 2
        %s311 = scalar_lea.vmem [#allocation7], %s310
        %312 = vst [vmem:[%s311] sm:$0x3] %v289
        %p313 = scmp.eq.s32.totalorder %s20, 1
        // Predicated region
        $region49: #{_fe_fc_call.1} parent=39 // pred_check
          %p314 = pneg %p313
        $region50: #{_fe_fc_call.1} parent=39 // pred_check_branch
          %316 = sbr.rel (%p314) target = $region52
        $region51: #{_fe_fc_call.1} parent=39 // pred_region
          %v317 = vld [vmem:[#allocation2] sm:$0x3]
          %v318 = vmul.f32 %v317, 0.00390625
          %v319 = vld [vmem:[#allocation3] sm:$0x3]
          %v320 = vmul.f32 %v319, 0.00390625
          %v321 = vmul.f32 %v318, %v318
          %v322 = vsub.f32 %v320, %v321
          %v323 = vmax.f32 %v322, 0.0
          %v324 = vadd.f32 %v323, 1e-05
          %v325 = vrsqrt.pop %v324
          %v326 = vmul.f32 %v325, %v324
          %v327 = vmul.f32 %v326, %v325
          %v328 = vmul.f32 0.5, %v327
          %v329 = vsub.f32 1.5, %v328
          %v330 = vmul.f32 %v325, %v329
          %vm331 = vweird.f32 %v324
          %vm332 = vweird.f32 %v325
          %vm333 = vmor %vm331, %vm332
          %v334 = vsel %vm333, %v325, %v330
          %v335 = vld [vmem:[#allocation7] sm:$0xf]
          %337 = vset.pattern.permute.xlu0 0
          %338 = vperm.xlu0 %337, %v318
          %v339 = vpop.permute.xlu0 %338
          %v341 = vunpack.c.l.s4 269488144
          %v342 = vunpack.c.0.s8 %v341
          %v343 = vperm.slane %v339, %v342
          %v345 = vsub.f32 %v335, %v343
          %347 = vset.pattern.permute.xlu0 0
          %348 = vperm.xlu0 %347, %v334
          %v349 = vpop.permute.xlu0 %348
          %v351 = vunpack.c.l.s4 269488144
          %v352 = vunpack.c.0.s8 %v351
          %v353 = vperm.slane %v349, %v352
          %v355 = vmul.f32 %v345, %v353
          %v356 = vld [vmem:[%s3] sm:$0x3]
          %v358 = vperm.slane %v356, 0
          %v359 = vperm.slane %v356, 1
          %v360 = vrot.slane %v359, 6
          %v361 = vsel %vm293, %v358, %v360
          %v363 = vmul.f32 %v355, %v361
          %v364 = vld [vmem:[%s4] sm:$0x3]
          %v366 = vperm.slane %v364, 0
          %v367 = vperm.slane %v364, 1
          %v368 = vrot.slane %v367, 6
          %v369 = vsel %vm293, %v366, %v368
          %v371 = vadd.f32 %v363, %v369
          %v372 = vmax.f32 %v371, 0.0
          %v373 = vand.u32 2147483647, %v371
          %v374 = vsub.f32 0.0, %v373
          %v375 = vmul.f32 %v374, 1.442695
          %v376 = vpow.pop %v375
          %v377 = vadd.f32 %v376, 1.0
          %v378 = vlog2.pop %v377
          %v379 = vmul.f32 %v378, 0.6931472
          %v380 = vmul.f32 -0.5, %v376
          %v381 = vadd.f32 %v380, 1.0
          %v382 = vmul.f32 %v381, %v376
          %v383 = vand.u32 2147483647, %v376
          %vm384 = vcmp.lt.f32.partialorder %v383, 0.0004427343
          %v385 = vsel %vm384, %v382, %v379
          %v386 = vadd.f32 %v372, %v385
          %387 = vst [vmem:[#allocation7] sm:$0xf] %v386
        $region52: #{_fe_fc_call.1} parent=39 // pred_fallthru
          _
        // Predicated region
        $region53: #{_fe_fc_call.1} parent=39 // pred_check
          %p388 = pneg %p148
        $region54: #{_fe_fc_call.1} parent=39 // pred_check_branch
          %390 = sbr.rel (%p388) target = $region56
        $region55: #{_fe_fc_call.1} parent=39 // pred_region
          %392 = vsyncadd [#allocation6], 0
          %s394 = sshll.u32 [#allocation7], 4
          %s395 = int_to_ptr.vmem [resolvable:$true] %s394
          %s396 = sshll.u32 %s5, 4
          %s397 = int_to_ptr.hbm [resolvable:$true] %s396
          %399 = dma.vmem_to_hbm [thread:$0]  %s395, 64, %s397, [#allocation6]
        $region56: #{_fe_fc_call.1} parent=39 // pred_fallthru
          _
        // Predicated region
        $region57: #{_fe_fc_call.1} parent=39 // pred_check
          %p400 = pneg %p148
        $region58: #{_fe_fc_call.1} parent=39 // pred_check_branch
          %402 = sbr.rel (%p400) target = $region60
        $region59: #{_fe_fc_call.1} parent=39 // pred_region
          %404 = dma.done [#allocation6], 64
        $region60: #{_fe_fc_call.1} parent=39 // pred_fallthru
          _
      $region40: #{_fe_fc_call.1} parent=5 // pred_fallthru
        _
      %p405 = scmp.le.s32.totalorder 2, %s15
      // Predicated region
      $region61: #{_fe_fc_call.1} parent=5 // pred_check
        %p406 = pneg %p405
      $region62: #{_fe_fc_call.1} parent=5 // pred_check_branch
        %408 = sbr.rel (%p406) target = $region64
      $region63: #{_fe_fc_call.1} parent=5 // pred_region
        %s409 = ssub.s32 %s15, 2
      $region64: #{_fe_fc_call.1} parent=5 // pred_fallthru
        _
    $region6: #{_fe_fc_call.1} parent=1 // loop_footer
      %s19 = sadd.s32 1, %s15
    $region7: #{_fe_fc_call.1} parent=1 // loop_footer_branch
      %14 = sbr.rel target = $region3
    $region8: #{_fe_fc_call.1} parent=1 // loop_exit
      _
    %410 = vsyncpa [#allocation5], 1
    %s411 = scalar_lea.sflag [#allocation5], 1
    %412 = vsyncpa %s411, 1
    %413 = vsyncpa [#allocation6], 1
    %s414 = scalar_lea.sflag [#allocation6], 1
    %415 = vsyncpa %s414, 1

</llo_original>
